<compile_context>
chip_gen: v7x
topology: tpu7x:2x2x1
jax: 0.10.0
libtpu: 0.0.40
codegen_flags: <defaults>
</compile_context>

<pallas_src>
import functools

import jax
import jax.numpy as jnp
from jax.experimental import pallas as pl
from jax.experimental.pallas import tpu as pltpu


def _gem_kernel(p_ref, x_ref, o_ref, acc_ref, *, eps, hw, t_hw, needs_mask):
    """One grid step of the tiled HW reduction.

    p_ref  : (1,)           SMEM   learnable exponent p
    x_ref  : (Bn, C, T_hw)  VMEM   input tile (HW on lanes)
    o_ref  : (Bn, 1, C)     VMEM   output block (written on last HW step)
    acc_ref: (Bn, C) f32    VMEM   running sum of clamp(x, eps)**p over HW
    """
    k = pl.program_id(1)

    @pl.when(k == 0)
    def _():
        acc_ref[...] = jnp.zeros_like(acc_ref)

    p = p_ref[0]
    x = x_ref[...].astype(jnp.float32)           # (Bn, C, T_hw)
    v = jnp.maximum(x, eps)                      # clamp(min=eps) -> strictly positive
    v = jnp.exp(p * jnp.log(v))                  # v ** p (dynamic float exponent)

    if needs_mask:                               # static: only when HW % T_hw != 0
        lane = k * t_hw + jax.lax.broadcasted_iota(jnp.int32, v.shape, 2)
        v = jnp.where(lane < hw, v, 0.0)         # keep padded lanes out of the sum

    acc_ref[...] += jnp.sum(v, axis=-1)          # partial sum over this HW tile

    @pl.when(k == pl.num_programs(1) - 1)
    def _():
        inv_p = 1.0 / p                          # computed once, not per element
        m = acc_ref[...] * (1.0 / hw)            # mean over H*W        -> (Bn, C)
        out = jnp.exp(jnp.log(m) * inv_p)        # mean ** (1/p)
        o_ref[...] = out[:, None, :].astype(o_ref.dtype)   # (Bn, 1, C) lane-dense


def _choose_tiles(n, c, hw, itemsize, target_bytes=2 * 1024 * 1024):
    """Pick (Bn, T_hw) so one input tile is ~target_bytes (double-buffered ~2x)."""
    # HW tile: biggest multiple of 128 under budget, or the full extent
    # (a block dim equal to the full array dim is always legal).
    max_t = max(128, (target_bytes // max(1, c * itemsize)) // 128 * 128)
    t_hw = hw if hw <= max_t else max_t
    # Batch block: grow while the tile stays under budget, Bn divides N, and
    # we keep >= 2 batch blocks so the 'parallel' axis can shard across cores.
    bn = 1
    while (n % (bn * 2) == 0
           and (bn * 2) * c * t_hw * itemsize <= target_bytes
           and n // (bn * 2) >= 2):
        bn *= 2
    return bn, t_hw


def gem_forward(x, p, eps=1e-6):
    """x: (N, C, H, W), p: (1,)  ->  (N, C, 1, 1).  GeM pooling forward."""
    N, C, H, W = x.shape
    hw = H * W
    x2 = x.reshape(N, C, hw)

    bn, t_hw = _choose_tiles(N, C, hw, x.dtype.itemsize)
    n_hw_blocks = pl.cdiv(hw, t_hw)
    needs_mask = (hw % t_hw) != 0

    kernel = functools.partial(
        _gem_kernel, eps=float(eps), hw=hw, t_hw=t_hw, needs_mask=needs_mask)

    out = pl.pallas_call(
        kernel,
        out_shape=jax.ShapeDtypeStruct((N, 1, C), x.dtype),
        grid=(N // bn, n_hw_blocks),
        in_specs=[
            pl.BlockSpec(memory_space=pltpu.MemorySpace.SMEM),     # p scalar
            pl.BlockSpec((bn, C, t_hw), lambda b, k: (b, 0, k)),   # input tile
        ],
        out_specs=pl.BlockSpec((bn, 1, C), lambda b, k: (b, 0, 0)),
        scratch_shapes=[pltpu.VMEM((bn, C), jnp.float32)],          # accumulator
        compiler_params=pltpu.CompilerParams(
            dimension_semantics=("parallel", "arbitrary")),
    )(p.astype(jnp.float32), x2)

    return out.reshape(N, C, 1, 1)


def gem_reference(x, p, eps=1e-6):
    # Pure-JAX reference mirroring the PyTorch forward.
    pv = p[0]
    v = jnp.maximum(x, eps) ** pv
    m = jnp.mean(v, axis=(-2, -1), keepdims=True)
    return m ** (1.0 / pv)


if __name__ == "__main__":
    key = jax.random.PRNGKey(0)
    N, C, H, W = 2, 4, 16, 16
    x = jax.random.normal(key, (N, C, H, W), dtype=jnp.float32)

    # Deterministic parameter init, matching nn.Parameter(torch.ones(1) * 3)
    p = jnp.ones((1,), dtype=jnp.float32) * 3.0
    eps = 1e-6

    out = gem_forward(x, p, eps)
    jax.block_until_ready(out)

    ref = gem_reference(x, p, eps)
    assert out.shape == (N, C, 1, 1)
    assert jnp.allclose(out, ref, rtol=1e-5, atol=1e-6), (out, ref)

    print("KERNEL_OK")
</pallas_src>

<mosaic_0001>
module attributes {stable_mosaic.version = 11 : i64} {
  func.func @_gem_kernel(%arg0: i32, %arg1: i32, %arg2: memref<1xf32, #tpu.memory_space<smem>>, %arg3: memref<1x4x256xf32, #tpu.memory_space<vmem>>, %arg4: memref<1x1x4xf32, #tpu.memory_space<vmem>>, %arg5: memref<1x4xf32, #tpu.memory_space<vmem>>) attributes {dimension_semantics = [#tpu.dimension_semantics<parallel>, #tpu.dimension_semantics<arbitrary>], iteration_bounds = array<i64: 2, 1>, scalar_prefetch = 0 : i64, scratch_operands = 1 : i64, tpu.core_type = #tpu.core_type<tc>, window_params = [{transform_indices = @transform_0, window_bounds = array<i64: 1>}, {transform_indices = @transform_1, window_bounds = array<i64: 1, 4, 256>}, {transform_indices = @transform_2, window_bounds = array<i64: 1, 1, 4>}]} {
    %c0_i32 = arith.constant 0 : i32
    %0 = arith.cmpi eq, %arg1, %c0_i32 : i32
    %1 = arith.extui %0 : i1 to i32
    %c0_i32_0 = arith.constant 0 : i32
    %2 = arith.cmpi ne, %1, %c0_i32_0 : i32
    scf.if %2 {
      %cst_11 = arith.constant 0.000000e+00 : f32
      %18 = vector.broadcast %cst_11 : f32 to vector<1x4xf32>
      %c0_12 = arith.constant 0 : index
      %c0_13 = arith.constant 0 : index
      %19 = vector.load %arg5[%c0_12, %c0_13] : memref<1x4xf32, #tpu.memory_space<vmem>>, vector<1x4xf32>
      tpu.vector_store %arg5[%c0_12, %c0_13], %18 {strides = array<i32>} : memref<1x4xf32, #tpu.memory_space<vmem>>, vector<1x4xf32>,
    } else {
    }
    %c0 = arith.constant 0 : index
    %3 = memref.load %arg2[%c0] : memref<1xf32, #tpu.memory_space<smem>>
    %c0_1 = arith.constant 0 : index
    %c0_2 = arith.constant 0 : index
    %c0_3 = arith.constant 0 : index
    %4 = vector.load %arg3[%c0_1, %c0_2, %c0_3] : memref<1x4x256xf32, #tpu.memory_space<vmem>>, vector<1x4x256xf32>
    %cst = arith.constant 9.99999997E-7 : f32
    %5 = vector.broadcast %cst : f32 to vector<1x4x256xf32>
    %6 = arith.maximumf %4, %5 : vector<1x4x256xf32>
    %7 = math.log %6 : vector<1x4x256xf32>
    %8 = vector.broadcast %3 : f32 to vector<1x4x256xf32>
    %9 = arith.mulf %8, %7 : vector<1x4x256xf32>
    %10 = math.exp %9 : vector<1x4x256xf32>
    %c0_4 = arith.constant 0 : index
    %c0_5 = arith.constant 0 : index
    %11 = vector.load %arg5[%c0_4, %c0_5] : memref<1x4xf32, #tpu.memory_space<vmem>>, vector<1x4xf32>
    %cst_6 = arith.constant dense<0.000000e+00> : vector<1x4xf32>
    %12 = vector.multi_reduction <add>, %10, %cst_6 [2] : vector<1x4x256xf32> to vector<1x4xf32>
    %13 = arith.addf %11, %12 : vector<1x4xf32>
    %c0_7 = arith.constant 0 : index
    %c0_8 = arith.constant 0 : index
    %14 = vector.load %arg5[%c0_7, %c0_8] : memref<1x4xf32, #tpu.memory_space<vmem>>, vector<1x4xf32>
    tpu.vector_store %arg5[%c0_7, %c0_8], %13 {strides = array<i32>} : memref<1x4xf32, #tpu.memory_space<vmem>>, vector<1x4xf32>,
    %c0_i32_9 = arith.constant 0 : i32
    %15 = arith.cmpi eq, %arg1, %c0_i32_9 : i32
    %16 = arith.extui %15 : i1 to i32
    %c0_i32_10 = arith.constant 0 : i32
    %17 = arith.cmpi ne, %16, %c0_i32_10 : i32
    scf.if %17 {
      %cst_11 = arith.constant 1.000000e+00 : f32
      %18 = arith.divf %cst_11, %3 : f32
      %c0_12 = arith.constant 0 : index
      %c0_13 = arith.constant 0 : index
      %19 = vector.load %arg5[%c0_12, %c0_13] : memref<1x4xf32, #tpu.memory_space<vmem>>, vector<1x4xf32>
      %cst_14 = arith.constant 3.906250e-03 : f32
      %20 = vector.broadcast %cst_14 : f32 to vector<1x4xf32>
      %21 = arith.mulf %19, %20 : vector<1x4xf32>
      %22 = math.log %21 : vector<1x4xf32>
      %23 = vector.broadcast %18 : f32 to vector<1x4xf32>
      %24 = arith.mulf %22, %23 : vector<1x4xf32>
      %25 = math.exp %24 : vector<1x4xf32>
      %26 = vector.shape_cast %25 : vector<1x4xf32> to vector<1x1x4xf32>
      %c0_15 = arith.constant 0 : index
      %c0_16 = arith.constant 0 : index
      %c0_17 = arith.constant 0 : index
      %27 = vector.load %arg4[%c0_15, %c0_16, %c0_17] : memref<1x1x4xf32, #tpu.memory_space<vmem>>, vector<1x1x4xf32>
      tpu.vector_store %arg4[%c0_15, %c0_16, %c0_17], %26 {strides = array<i32>} : memref<1x1x4xf32, #tpu.memory_space<vmem>>, vector<1x1x4xf32>,
    } else {
    }
    return
  }
  func.func @transform_0(%arg0: i32, %arg1: i32) -> i32 {
    %c0_i32 = arith.constant 0 : i32
    %c0_i32_0 = arith.constant 0 : i32
    return %c0_i32 : i32
  }
  func.func @transform_1(%arg0: i32, %arg1: i32) -> (i32, i32, i32) {
    %c0_i32 = arith.constant 0 : i32
    %c0_i32_0 = arith.constant 0 : i32
    return %arg0, %c0_i32, %arg1 : i32, i32, i32
  }
  func.func @transform_2(%arg0: i32, %arg1: i32) -> (i32, i32, i32) {
    %c0_i32 = arith.constant 0 : i32
    %c0_i32_0 = arith.constant 0 : i32
    %c0_i32_1 = arith.constant 0 : i32
    return %arg0, %c0_i32, %c0_i32_0 : i32, i32, i32
  }
}

</mosaic_0001>

<llo_original>
// kernel: tpu_custom_call.1
$region0: #{tpu_custom_call.1}
  #allocation0 [shape = 'u32[]', space=smem, size = 0x4, offset = 0x4, fixed_abs, tag = 'smem constant byte address 0x4 - core index']
  #allocation1 [shape = 'u32[144,128]{1,0:T(1,128)}', space=vmem, size = 0x12000, scoped, tag = 'internal scratch']
  #allocation2 [shape = 'f32[1,4]{1,0:T(1,128)}', space=vmem, size = 0x200, scoped, tag = 'scratch operand']
  #allocation3 [shape = 'f32[1]{0:T(128)S(6)}', space=smem, size = 0x200, scoped, tag = 'scoped memory for tpu_custom_call.1']
  %s0 = inlined_call_operand.<no memory space> [shape: f32[1], index: 0, kind: input, shape index: {}]
  %s1 = inlined_call_operand.hbm [shape: f32[2,4,256], index: 1, kind: input, shape index: {}]
  %s2 = inlined_call_operand.hbm [shape: f32[2,1,4], index: 2, kind: output, shape index: {}]
  %s3 = sld [smem:[#allocation0]]
  $region53: #{tpu_custom_call.1} parent=0
    _
  %s5 = ssub.s32 1, %s3
  %s6 = scalar_select 0, %s5, %s3
  %7 = sst [smem:[#allocation3]] %s0
  $region1: #{tpu_custom_call.1} parent=0
    #allocation4 [shape = 'u8[8192]{0}', space=vmem, size = 0x2000, scoped, tag = 'input window, operand 1']
    #allocation5 [shape = 's32[2]{0}', space=sflag, size = 0x8, scoped, tag = 'scoped memory for tpu_custom_call.1']
    #allocation6 [shape = 's32[2]{0}', space=sflag, size = 0x8, scoped, tag = 'scoped memory for tpu_custom_call.1']
    #allocation7 [shape = 'u8[1024]{0}', space=vmem, size = 0x400, scoped, tag = 'output window, operand 0']
    %8 = vsyncpa [#allocation5], 0
    %s9 = scalar_lea.sflag [#allocation5], 1
    %10 = vsyncpa %s9, 0
    %11 = vsyncpa [#allocation6], 0
    %s12 = scalar_lea.sflag [#allocation6], 1
    %13 = vsyncpa %s12, 0
    loop: start=0, step=1, limit=4
    $region2: #{tpu_custom_call.1} parent=1 // loop_pre_header
      _
    $region3: #{tpu_custom_call.1} parent=1 // loop_header
      %s15 = sphi 0, %s19
      %p16 = scmp.ge.s32.totalorder %s15, 4
      %s22 = sphi 0, %s34
      %s23 = sphi 0, %s30
      %s24 = sphi 0, %s22
      %s25 = sphi 0, %s23
      %s26 = sphi 0, %s24
      %s27 = sphi 0, %s25
      %s35 = sphi 0, %s35
      %s37 = sphi 0, %s35
      %s38 = sphi 0, %s37
      %s52 = sphi 0, %s38
      %s60 = sphi 0, %s62
      %s63 = sphi 0, %s60
      %s64 = sphi 0, %s63
      %s80 = sphi 0, %s64
      %s86 = sphi 0, %s88
      %s89 = sphi 0, %s86
      %s90 = sphi 0, %s89
      %s106 = sphi 0, %s90
    $region4: #{tpu_custom_call.1} parent=1 // loop_header_branch
      %18 = sbr.rel (%p16) target = $region8
    $region5: #{tpu_custom_call.1} parent=1 // loop_body
      %s20 = ssub.s32 %s15, 1
      %s21 = ssub.s32 %s15, 2
      %s28 = sadd.s32 1, %s23
      %p29 = scmp.ge.s32.totalorder %s28, 1
      %s30 = scalar_select %p29, 0, %s28
      %s31 = sadd.s32 1, %s22
      %s32 = scalar_select %p29, %s31, %s22
      %p33 = scmp.ge.s32.totalorder %s32, 2
      %s34 = scalar_select %p33, 0, %s32
      %s36 = sadd.s32 %s35, 1
      %p39 = scmp.eq.s32.totalorder %s15, 1
      %p40 = scmp.ne.s32.totalorder %s35, %s37
      %p41 = scmp.eq.s32.totalorder %s15, 0
      %p42 = por %p40, %p41
      %p43 = scmp.ne.s32.totalorder %s35, %s37
      %p44 = scmp.eq.s32.totalorder %s20, 1
      %p45 = por %p43, %p44
      %p46 = scmp.ne.s32.totalorder %s37, %s38
      %p47 = scmp.eq.s32.totalorder %s20, 0
      %p48 = por %p46, %p47
      %p49 = scmp.ne.s32.totalorder %s37, %s38
      %p50 = scmp.eq.s32.totalorder %s21, 1
      %p51 = por %p49, %p50
      %p53 = scmp.ne.s32.totalorder %s38, %s52
      %p54 = scmp.eq.s32.totalorder %s21, 0
      %p55 = por %p53, %p54
      %s56 = ssub.s32 %s22, %s34
      %s57 = ssub.s32 %s23, %s30
      %s58 = sor.u32 %s56, %s57
      %p59 = scmp.eq.s32.totalorder %s58, 0
      %s61 = sadd.s32 %s60, 1
      %s62 = scalar_select %p59, %s60, %s61
      %p65 = pneg %p59
      %p66 = scmp.eq.s32.totalorder %s15, 1
      %p67 = por %p65, %p66
      %p68 = scmp.ne.s32.totalorder %s60, %s63
      %p69 = scmp.eq.s32.totalorder %s15, 0
      %p70 = por %p68, %p69
      %p71 = scmp.ne.s32.totalorder %s60, %s63
      %p72 = scmp.eq.s32.totalorder %s20, 1
      %p73 = por %p71, %p72
      %p74 = scmp.ne.s32.totalorder %s63, %s64
      %p75 = scmp.eq.s32.totalorder %s20, 0
      %p76 = por %p74, %p75
      %p77 = scmp.ne.s32.totalorder %s63, %s64
      %p78 = scmp.eq.s32.totalorder %s21, 1
      %p79 = por %p77, %p78
      %p81 = scmp.ne.s32.totalorder %s64, %s80
      %p82 = scmp.eq.s32.totalorder %s21, 0
      %p83 = por %p81, %p82
      %s84 = ssub.s32 %s22, %s34
      %p85 = scmp.eq.s32.totalorder %s84, 0
      %s87 = sadd.s32 %s86, 1
      %s88 = scalar_select %p85, %s86, %s87
      %p91 = pneg %p85
      %p92 = scmp.eq.s32.totalorder %s15, 1
      %p93 = por %p91, %p92
      %p94 = scmp.ne.s32.totalorder %s86, %s89
      %p95 = scmp.eq.s32.totalorder %s15, 0
      %p96 = por %p94, %p95
      %p97 = scmp.ne.s32.totalorder %s86, %s89
      %p98 = scmp.eq.s32.totalorder %s20, 1
      %p99 = por %p97, %p98
      %p100 = scmp.ne.s32.totalorder %s89, %s90
      %p101 = scmp.eq.s32.totalorder %s20, 0
      %p102 = por %p100, %p101
      %p103 = scmp.ne.s32.totalorder %s89, %s90
      %p104 = scmp.eq.s32.totalorder %s21, 1
      %p105 = por %p103, %p104
      %p107 = scmp.ne.s32.totalorder %s90, %s106
      %p108 = scmp.eq.s32.totalorder %s21, 0
      %p109 = por %p107, %p108
      %p110 = scmp.le.s32.totalorder 1, %s15
      %p111 = scmp.lt.s32.totalorder %s15, 3
      %p112 = pnand %p110, %p111
      %p113 = pneg %p112
      // Predicated region
      $region9: #{tpu_custom_call.1} parent=5 // pred_check
        _
      $region10: #{tpu_custom_call.1} parent=5 // pred_check_branch
        %115 = sbr.rel (%p112) target = $region12
      $region11: #{tpu_custom_call.1} parent=5 // pred_region
        %s116 = ssub.s32 %s15, 1
        // Predicated region
        $region13: #{tpu_custom_call.1} parent=11 // pred_check
          %p117 = pneg %p48
        $region14: #{tpu_custom_call.1} parent=11 // pred_check_branch
          %119 = sbr.rel (%p117) target = $region16
        $region15: #{tpu_custom_call.1} parent=11 // pred_region
          _
        $region16: #{tpu_custom_call.1} parent=11 // pred_fallthru
          _
      $region12: #{tpu_custom_call.1} parent=5 // pred_fallthru
        _
      %p120 = scmp.lt.s32.totalorder %s15, 2
      // Predicated region
      $region17: #{tpu_custom_call.1} parent=5 // pred_check
        %p121 = pneg %p120
      $region18: #{tpu_custom_call.1} parent=5 // pred_check_branch
        %123 = sbr.rel (%p121) target = $region20
      $region19: #{tpu_custom_call.1} parent=5 // pred_region
        // Predicated region
        $region21: #{tpu_custom_call.1} parent=19 // pred_check
          %p124 = pneg %p70
        $region22: #{tpu_custom_call.1} parent=19 // pred_check_branch
          %126 = sbr.rel (%p124) target = $region24
        $region23: #{tpu_custom_call.1} parent=19 // pred_region
          %s127 = sand.u32 %s60, 1
          %s128 = scalar_lea.sflag [#allocation5], %s127
          %s129 = sand.u32 %s60, 1
          %s130 = smul.addr %s129, 8
          %s131 = scalar_lea.vmem [#allocation4], %s130
          %s132 = smul.u32 2, %s23
          %s134 = ssub.s32 128, 128
          %135 = vsyncadd %s128, %s134
          %s136 = smul.addr %s22, 2
          %s137 = sadd.s32 %s132, %s136
          %s138 = smul.addr %s137, 64
          %s139 = scalar_lea.hbm %s1, %s138
          %s141 = sshll.u32 %s131, 4
          %s142 = int_to_ptr.vmem [resolvable:$true] %s141
          %144 = dma.hbm_to_vmem [thread:$0]  %s139, 128, %s142, %s128
        $region24: #{tpu_custom_call.1} parent=19 // pred_fallthru
          _
      $region20: #{tpu_custom_call.1} parent=5 // pred_fallthru
        _
      %p145 = scmp.le.s32.totalorder 1, %s15
      %p146 = scmp.lt.s32.totalorder %s15, 3
      %p147 = pnand %p145, %p146
      %p148 = pneg %p147
      // Predicated region
      $region25: #{tpu_custom_call.1} parent=5 // pred_check
        _
      $region26: #{tpu_custom_call.1} parent=5 // pred_check_branch
        %150 = sbr.rel (%p147) target = $region28
      $region27: #{tpu_custom_call.1} parent=5 // pred_region
        %s151 = ssub.s32 %s15, 1
        %s152 = sand.u32 %s63, 1
        %s153 = scalar_lea.sflag [#allocation5], %s152
        %s154 = sand.u32 %s63, 1
        %s155 = smul.addr %s154, 8
        %s156 = scalar_lea.vmem [#allocation4], %s155
        // Predicated region
        $region29: #{tpu_custom_call.1} parent=27 // pred_check
          %p157 = pneg %p76
        $region30: #{tpu_custom_call.1} parent=27 // pred_check_branch
          %159 = sbr.rel (%p157) target = $region32
        $region31: #{tpu_custom_call.1} parent=27 // pred_region
          %160 = dma.done %s153, 128
        $region32: #{tpu_custom_call.1} parent=27 // pred_fallthru
          _
        %p161 = pneg %p48
        %p162 = pneg %p45
        %s163 = sand.u32 %s63, 1
        %s164 = scalar_lea.sflag [#allocation5], %s163
        %s165 = sand.u32 %s63, 1
        %s166 = smul.addr %s165, 8
        %s167 = scalar_lea.vmem [#allocation4], %s166
        %p168 = pneg %p76
        %p169 = pneg %p73
        %p170 = pneg %p102
        %p171 = pneg %p99
        %s172 = sand.u32 %s89, 1
        %s173 = scalar_lea.sflag [#allocation6], %s172
        %s174 = sand.u32 %s89, 1
        %s175 = scalar_lea.vmem [#allocation7], %s174
        %s176 = smul.u32 2, %s25
        %p177 = scmp.eq.s32.totalorder %s25, 0
        // Predicated region
        $region33: #{tpu_custom_call.1} parent=27 // pred_check
          %p178 = pneg %p177
        $region34: #{tpu_custom_call.1} parent=27 // pred_check_branch
          %180 = sbr.rel (%p178) target = $region36
        $region35: #{tpu_custom_call.1} parent=27 // pred_region
          %vm181 = vcmask 24576
          %182 = vst.msk [vmem:[#allocation2] sm:$0x1] %vm181, 0.0
        $region36: #{tpu_custom_call.1} parent=27 // pred_fallthru
          _
        %s183 = sld [smem:[#allocation3]]
        %v184 = vld [vmem:[%s156] sm:$0xff]
        %v185 = vmax.f32 %v184, 1e-06
        %v186 = vlog2.pop %v185
        %v187 = vmul.f32 %v186, 0.6931472
        %v188 = vstv %s183
        %v189 = vmul.f32 %v188, %v187
        %v190 = vmul.f32 %v189, 1.442695
        %v191 = vpow.pop %v190
        %v192 = vld [vmem:[#allocation2] sm:$0x1]
        %v194 = vcombine.high %v191, %v191
        %vm196 = vcmask 1043456
        %v197 = vsel %vm196, %v191, 0.0
        %v198 = vsel %vm196, %v194, 0.0
        %v199 = vadd.f32 %v197, %v198
        %200 = vadd.xlane.f32.xlu0 %v199
        %v201 = vpop.xlane.xlu0 %200
        %v203 = vlaneseq
        %v204 = vshrl.u32 %v203, 7
        %v205 = vsub.s32 0, %v204
        %v206 = vrot.slane %v201, %v205
        %v207 = vlaneseq
        %v208 = vshrl.u32 %v207, 7
        %v209 = vsub.s32 1, %v208
        %v210 = vrot.slane %v201, %v209
        %v211 = vlaneseq
        %v212 = vshrl.u32 %v211, 7
        %v213 = vsub.s32 2, %v212
        %v214 = vrot.slane %v201, %v213
        %v215 = vlaneseq
        %v216 = vshrl.u32 %v215, 7
        %v217 = vsub.s32 3, %v216
        %v218 = vrot.slane %v201, %v217
        %v219 = vcombine.low %v206, %v210
        %v220 = vcombine.low %v214, %v218
        %v222 = vunpack.c.l.s4 1966171168
        %v223 = vunpack.c.0.s8 %v222
        %v224 = vlaneseq
        %v225 = vshrl.u32 %v224, 7
        %v226 = vsub.s32 %v223, %v225
        %v227 = vrot.slane %v219, %v226
        %v229 = vunpack.c.l.s4 1966171168
        %v230 = vunpack.c.0.s8 %v229
        %v231 = vlaneseq
        %v232 = vshrl.u32 %v231, 7
        %v233 = vsub.s32 %v230, %v232
        %v234 = vrot.slane %v220, %v233
        %v235 = vcombine.low %v227, %v234
        %v237 = vunpack.c.l.s4 1966171168
        %v238 = vunpack.c.0.s8 %v237
        %v239 = vlaneseq
        %v240 = vshrl.u32 %v239, 7
        %v241 = vsub.s32 %v238, %v240
        %v242 = vrot.slane %v235, %v241
        %243 = vset.pattern.permute.xlu0 0
        %244 = vperm.xlu0 %243, %v242
        %v245 = vpop.permute.xlu0 %244
        %v246 = vlaneseq
        %v247 = vand.u32 %v246, 127
        %v248 = vlaneseq
        %v249 = vshrl.u32 %v248, 7
        %v250 = vsub.s32 %v247, %v249
        %v251 = vrot.slane %v245, %v250
        %v253 = vunpack.c.l.s4 1966171168
        %v254 = vunpack.c.0.s8 %v253
        %v255 = vlaneseq
        %v256 = vshrl.u32 %v255, 7
        %v257 = vsub.s32 %v254, %v256
        %v258 = vrot.slane %v251, %v257
        %v260 = vunpack.c.l.s4 1966171168
        %v261 = vunpack.c.0.s8 %v260
        %v262 = vlaneseq
        %v263 = vshrl.u32 %v262, 7
        %v264 = vsub.s32 %v261, %v263
        %v265 = vrot.slane %v258, %v264
        %v267 = vadd.f32 %v192, %v265
        %vm268 = vcmask 24576
        %269 = vst.msk [vmem:[#allocation2] sm:$0x1] %vm268, %v267
        // Predicated region
        $region37: #{tpu_custom_call.1} parent=27 // pred_check
          %p270 = pneg %p177
        $region38: #{tpu_custom_call.1} parent=27 // pred_check_branch
          %272 = sbr.rel (%p270) target = $region40
        $region39: #{tpu_custom_call.1} parent=27 // pred_region
          %v273 = vstv %s183
          %v274 = vrcp.pop %v273
          %s275 = vtos %v274
          %v276 = vld [vmem:[#allocation2] sm:$0x1]
          %v277 = vmul.f32 %v276, 0.00390625
          %v278 = vlog2.pop %v277
          %v279 = vmul.f32 %v278, 0.6931472
          %v280 = vstv %s275
          %v281 = vmul.f32 %v279, %v280
          %v282 = vmul.f32 %v281, 1.442695
          %v283 = vpow.pop %v282
          %284 = vst.msk [vmem:[%s175] sm:$0x1] %vm268, %v283
        $region40: #{tpu_custom_call.1} parent=27 // pred_fallthru
          _
        %s285 = sand.u32 %s89, 1
        %s286 = scalar_lea.sflag [#allocation6], %s285
        %s287 = sand.u32 %s89, 1
        %s288 = scalar_lea.vmem [#allocation7], %s287
        // Predicated region
        $region41: #{tpu_custom_call.1} parent=27 // pred_check
          %p289 = pneg %p99
        $region42: #{tpu_custom_call.1} parent=27 // pred_check_branch
          %291 = sbr.rel (%p289) target = $region44
        $region43: #{tpu_custom_call.1} parent=27 // pred_region
          %s293 = ssub.s32 16, 16
          %294 = vsyncadd %s286, %s293
          %s295 = smul.addr %s24, 16
          %s296 = scalar_lea.hbm %s2, %s295
          %s298 = sshll.u32 %s288, 4
          %s299 = int_to_ptr.vmem [resolvable:$true] %s298
          %301 = dma.vmem_to_hbm [thread:$0]  %s299, 16, %s296, %s286
        $region44: #{tpu_custom_call.1} parent=27 // pred_fallthru
          _
      $region28: #{tpu_custom_call.1} parent=5 // pred_fallthru
        _
      %p302 = scmp.le.s32.totalorder 2, %s15
      // Predicated region
      $region45: #{tpu_custom_call.1} parent=5 // pred_check
        %p303 = pneg %p302
      $region46: #{tpu_custom_call.1} parent=5 // pred_check_branch
        %305 = sbr.rel (%p303) target = $region48
      $region47: #{tpu_custom_call.1} parent=5 // pred_region
        %s306 = ssub.s32 %s15, 2
        // Predicated region
        $region49: #{tpu_custom_call.1} parent=47 // pred_check
          %p307 = pneg %p105
        $region50: #{tpu_custom_call.1} parent=47 // pred_check_branch
          %309 = sbr.rel (%p307) target = $region52
        $region51: #{tpu_custom_call.1} parent=47 // pred_region
          %s310 = sand.u32 %s90, 1
          %s311 = scalar_lea.sflag [#allocation6], %s310
          %s312 = sand.u32 %s90, 1
          %s313 = scalar_lea.vmem [#allocation7], %s312
          %314 = dma.done %s311, 16
        $region52: #{tpu_custom_call.1} parent=47 // pred_fallthru
          _
      $region48: #{tpu_custom_call.1} parent=5 // pred_fallthru
        _
    $region6: #{tpu_custom_call.1} parent=1 // loop_footer
      %s19 = sadd.s32 1, %s15
    $region7: #{tpu_custom_call.1} parent=1 // loop_footer_branch
      %14 = sbr.rel target = $region3
    $region8: #{tpu_custom_call.1} parent=1 // loop_exit
      _
    %315 = vsyncpa [#allocation5], 1
    %s316 = scalar_lea.sflag [#allocation5], 1
    %317 = vsyncpa %s316, 1
    %318 = vsyncpa [#allocation6], 1
    %s319 = scalar_lea.sflag [#allocation6], 1
    %320 = vsyncpa %s319, 1

</llo_original>
